<compile_context>
chip_gen: v6e
topology: v6e:2x2x1
jax: 0.10.0
libtpu: 0.0.40
codegen_flags: <defaults>
</compile_context>

<pallas_src>
import jax
import jax.numpy as jnp
from jax.experimental import pallas as pl
from jax.experimental.pallas import tpu as pltpu


def _round_up(x, m):
    return ((x + m - 1) // m) * m


# ---------------------------------------------------------------------------
# Pass 1: per-tile h = x @ W1, accumulate sum(h) and sum(h^2) over the batch.
# ---------------------------------------------------------------------------
def _stats_kernel(x_ref, w1_ref, stat_ref):
    @pl.when(pl.program_id(0) == 0)
    def _init():
        stat_ref[...] = jnp.zeros_like(stat_ref)

    x = x_ref[...]
    if x.dtype != jnp.bfloat16:
        x = x.astype(jnp.bfloat16)                       # MXU operands in bf16
    h = jnp.dot(x, w1_ref[...], preferred_element_type=jnp.float32)  # (TN, H) f32
    upd = jnp.concatenate(
        [jnp.sum(h, axis=0, keepdims=True),
         jnp.sum(h * h, axis=0, keepdims=True)], axis=0)             # (2, H)
    stat_ref[...] += upd


# ---------------------------------------------------------------------------
# Pass 2: recompute h, apply folded BN (h*s + t), ReLU, classifier matmul.
# ---------------------------------------------------------------------------
def _apply_kernel(x_ref, w1_ref, s_ref, t_ref, w2_ref, b2_ref, o_ref):
    x = x_ref[...]
    if x.dtype != jnp.bfloat16:
        x = x.astype(jnp.bfloat16)
    h = jnp.dot(x, w1_ref[...], preferred_element_type=jnp.float32)  # (TN, H) f32
    h = h * s_ref[...] + t_ref[...]                                  # folded BN (1 FMA)
    h = jnp.maximum(h, 0.0)                                          # ReLU
    out = jnp.dot(h.astype(jnp.bfloat16), w2_ref[...],
                  preferred_element_type=jnp.float32)                # (TN, Cpad)
    o_ref[...] = (out + b2_ref[...]).astype(o_ref.dtype)


def downstream_decoder(rep, w1_t, gamma, beta, w2_t, b2, *, eps=1e-5, block_n=None):
    """rep: (N, 512). Returns (N, num_classes) float32 logits (training-mode BN)."""
    n, feat = rep.shape
    hidden = w1_t.shape[1]
    num_classes = w2_t.shape[1]

    # --- batch tiling / zero padding -----------------------------------------
    if block_n is None:
        tn = min(1024, _round_up(n, 16))
    else:
        tn = _round_up(block_n, 16)
    n_pad = _round_up(n, tn)
    x = rep
    if n_pad != n:
        # Zero rows give h == 0 (Linear1 has no bias), so they contribute
        # nothing to sum/sumsq; stats stay exact since we divide by true n.
        x = jnp.pad(x, ((0, n_pad - n), (0, 0)))
    grid = (n_pad // tn,)

    # --- weight prep (tiny, XLA-side) -----------------------------------------
    w1b = w1_t.astype(jnp.bfloat16)                               # (feat, hidden)
    c_pad = _round_up(max(num_classes, 128), 128)                 # lane-dense output
    w2p = jnp.zeros((hidden, c_pad), jnp.bfloat16)
    w2p = w2p.at[:, :num_classes].set(w2_t.astype(jnp.bfloat16))
    b2p = jnp.zeros((1, c_pad), jnp.float32)
    b2p = b2p.at[:, :num_classes].set(b2.reshape(1, -1).astype(jnp.float32))

    x_bytes = n_pad * feat * jnp.dtype(x.dtype).itemsize
    w1_bytes = feat * hidden * 2
    vmem_limit = 32 * 1024 * 1024                                 # v7x-safe

    # --- pass 1: global batch statistics ---------------------------------------
    stats = pl.pallas_call(
        _stats_kernel,
        out_shape=jax.ShapeDtypeStruct((2, hidden), jnp.float32),
        grid=grid,
        in_specs=[
            pl.BlockSpec((tn, feat), lambda i: (i, 0)),
            pl.BlockSpec((feat, hidden), lambda i: (0, 0)),
        ],
        out_specs=pl.BlockSpec((2, hidden), lambda i: (0, 0)),
        compiler_params=pltpu.CompilerParams(
            dimension_semantics=("arbitrary",),
            vmem_limit_bytes=vmem_limit),
        cost_estimate=pl.CostEstimate(
            flops=2 * n_pad * feat * hidden + 4 * n_pad * hidden,
            transcendentals=0,
            bytes_accessed=x_bytes + w1_bytes + 2 * hidden * 4),
    )(x, w1b)

    # --- finalize BN: fold mean/var/gamma/beta into one scale + shift (f32) ----
    mean = stats[0] / float(n)
    var = jnp.maximum(stats[1] / float(n) - mean * mean, 0.0)    # biased (training) var
    s = (gamma.reshape(-1) * jax.lax.rsqrt(var + eps)).reshape(1, hidden)
    t = (beta.reshape(-1) - mean * s.reshape(-1)).reshape(1, hidden)

    # --- pass 2: apply BN + ReLU + classifier ----------------------------------
    out = pl.pallas_call(
        _apply_kernel,
        out_shape=jax.ShapeDtypeStruct((n_pad, c_pad), jnp.float32),
        grid=grid,
        in_specs=[
            pl.BlockSpec((tn, feat), lambda i: (i, 0)),
            pl.BlockSpec((feat, hidden), lambda i: (0, 0)),
            pl.BlockSpec((1, hidden), lambda i: (0, 0)),
            pl.BlockSpec((1, hidden), lambda i: (0, 0)),
            pl.BlockSpec((hidden, c_pad), lambda i: (0, 0)),
            pl.BlockSpec((1, c_pad), lambda i: (0, 0)),
        ],
        out_specs=pl.BlockSpec((tn, c_pad), lambda i: (i, 0)),
        compiler_params=pltpu.CompilerParams(
            dimension_semantics=("parallel",),
            vmem_limit_bytes=vmem_limit),
        cost_estimate=pl.CostEstimate(
            flops=2 * n_pad * feat * hidden + 2 * n_pad * hidden * c_pad
                  + 3 * n_pad * hidden,
            transcendentals=0,
            bytes_accessed=x_bytes + w1_bytes + hidden * c_pad * 2
                           + n_pad * c_pad * 4),
    )(x, w1b, s.astype(jnp.float32), t.astype(jnp.float32), w2p, b2p)

    return out[:n, :num_classes]


def init_params(key, input_channel=512, hidden=256, number_class=10):
    """Deterministic synthetic parameters (PyTorch layouts, transposed for x@W)."""
    k1, k2, k3 = jax.random.split(key, 3)
    b1 = 1.0 / jnp.sqrt(float(input_channel))
    w1 = jax.random.uniform(k1, (hidden, input_channel), jnp.float32, -b1, b1)
    b2s = 1.0 / jnp.sqrt(float(hidden))
    w2 = jax.random.uniform(k2, (number_class, hidden), jnp.float32, -b2s, b2s)
    b2 = jax.random.uniform(k3, (number_class,), jnp.float32, -b2s, b2s)
    gamma = jnp.ones((hidden,), jnp.float32)    # BatchNorm1d weight
    beta = jnp.zeros((hidden,), jnp.float32)    # BatchNorm1d bias
    return w1.T, gamma, beta, w2.T, b2          # (512,256), (256,), (256,), (256,10), (10,)


def reference_decoder_f32(rep, w1_t, gamma, beta, w2_t, b2, eps=1e-5):
    """Pure-f32 JAX reference mirroring the PyTorch decoder forward."""
    h = rep.astype(jnp.float32) @ w1_t
    mean = jnp.mean(h, axis=0, keepdims=True)
    var = jnp.mean((h - mean) ** 2, axis=0, keepdims=True)
    h = (h - mean) * jax.lax.rsqrt(var + eps)
    h = h * gamma + beta
    h = jnp.maximum(h, 0.0)
    return h @ w2_t + b2


def reference_decoder_mixed(rep, w1_t, gamma, beta, w2_t, b2, eps=1e-5):
    """Reference mirroring the kernel's bf16-MXU / f32-accumulate numerics."""
    n = rep.shape[0]
    h = jnp.dot(rep.astype(jnp.bfloat16), w1_t.astype(jnp.bfloat16),
                preferred_element_type=jnp.float32)
    mean = jnp.sum(h, axis=0, keepdims=True) / n
    var = jnp.maximum(jnp.sum(h * h, axis=0, keepdims=True) / n - mean * mean, 0.0)
    s = gamma * jax.lax.rsqrt(var + eps)
    t = beta - mean * s
    h = jnp.maximum(h * s + t, 0.0)
    return jnp.dot(h.astype(jnp.bfloat16), w2_t.astype(jnp.bfloat16),
                   preferred_element_type=jnp.float32) + b2


if __name__ == "__main__":
    batch, input_channel, number_class = 40, 512, 10
    key = jax.random.PRNGKey(0)
    k_rep, k_par = jax.random.split(key)

    # Stand-in for flatten(encoder(x), start_dim=1): a (N, 512) representation.
    rep = jax.random.normal(k_rep, (batch, input_channel), jnp.float32)
    params = init_params(k_par, input_channel, 256, number_class)

    # block_n=16 forces a multi-tile grid (3 tiles, last partially zero-padded)
    # so the tiled-stats accumulation and padding paths are exercised even at
    # this small validation batch (production N should use the default tiling).
    out = downstream_decoder(rep, *params, block_n=16)
    out = jax.block_until_ready(out)
    assert out.shape == (batch, number_class)

    ref_mixed = reference_decoder_mixed(rep, *params)
    ref_f32 = reference_decoder_f32(rep, *params)
    assert jnp.allclose(out, ref_mixed, atol=5e-3, rtol=5e-3), \
        "mismatch vs bf16-mirrored reference"
    assert jnp.allclose(out, ref_f32, atol=7e-2, rtol=7e-2), \
        "mismatch vs f32 reference"

    print("KERNEL_OK")
</pallas_src>

<mosaic_0001>
module attributes {stable_mosaic.version = 11 : i64} {
  func.func @_stats_kernel(%arg0: i32, %arg1: memref<16x512xf32, #tpu.memory_space<vmem>>, %arg2: memref<512x256xbf16, #tpu.memory_space<vmem>>, %arg3: memref<2x256xf32, #tpu.memory_space<vmem>>) attributes {dimension_semantics = [#tpu.dimension_semantics<arbitrary>], iteration_bounds = array<i64: 3>, scalar_prefetch = 0 : i64, scratch_operands = 0 : i64, tpu.core_type = #tpu.core_type<tc>, window_params = [{transform_indices = @transform_0, window_bounds = array<i64: 16, 512>}, {pipeline_mode = #tpu.pipeline_mode<synchronous>, transform_indices = @transform_1, window_bounds = array<i64: 512, 256>}, {pipeline_mode = #tpu.pipeline_mode<synchronous>, transform_indices = @transform_2, window_bounds = array<i64: 2, 256>}]} {
    %c0_i32 = arith.constant 0 : i32
    %0 = arith.cmpi eq, %arg0, %c0_i32 : i32
    %1 = arith.extui %0 : i1 to i32
    %c0_i32_0 = arith.constant 0 : i32
    %2 = arith.cmpi ne, %1, %c0_i32_0 : i32
    scf.if %2 {
      %cst_10 = arith.constant 0.000000e+00 : f32
      %16 = vector.broadcast %cst_10 : f32 to vector<2x256xf32>
      %c0_11 = arith.constant 0 : index
      %c0_12 = arith.constant 0 : index
      %17 = vector.load %arg3[%c0_11, %c0_12] : memref<2x256xf32, #tpu.memory_space<vmem>>, vector<2x256xf32>
      tpu.vector_store %arg3[%c0_11, %c0_12], %16 {strides = array<i32>} : memref<2x256xf32, #tpu.memory_space<vmem>>, vector<2x256xf32>,
    } else {
    }
    %c0 = arith.constant 0 : index
    %c0_1 = arith.constant 0 : index
    %3 = vector.load %arg1[%c0, %c0_1] : memref<16x512xf32, #tpu.memory_space<vmem>>, vector<16x512xf32>
    %4 = arith.truncf %3 : vector<16x512xf32> to vector<16x512xbf16>
    %c0_2 = arith.constant 0 : index
    %c0_3 = arith.constant 0 : index
    %5 = vector.load %arg2[%c0_2, %c0_3] : memref<512x256xbf16, #tpu.memory_space<vmem>>, vector<512x256xbf16>
    %cst = arith.constant dense<0.000000e+00> : vector<16x256xf32>
    %6 = tpu.matmul %4, %5, %cst {dimension_numbers = #tpu.dot_dimension_numbers<[1], [0], [0], [1], [0, 0, 1, 1], [], []>} : vector<16x512xbf16>, vector<512x256xbf16>, vector<16x256xf32> -> vector<16x256xf32>
    %cst_4 = arith.constant dense<0.000000e+00> : vector<256xf32>
    %7 = vector.multi_reduction <add>, %6, %cst_4 [0] : vector<16x256xf32> to vector<256xf32>
    %8 = vector.shape_cast %7 : vector<256xf32> to vector<1x256xf32>
    %9 = arith.mulf %6, %6 : vector<16x256xf32>
    %cst_5 = arith.constant dense<0.000000e+00> : vector<256xf32>
    %10 = vector.multi_reduction <add>, %9, %cst_5 [0] : vector<16x256xf32> to vector<256xf32>
    %11 = vector.shape_cast %10 : vector<256xf32> to vector<1x256xf32>
    %12 = tpu.concatenate %8, %11 in 0 : vector<1x256xf32>, vector<1x256xf32> -> vector<2x256xf32>
    %c0_6 = arith.constant 0 : index
    %c0_7 = arith.constant 0 : index
    %13 = vector.load %arg3[%c0_6, %c0_7] : memref<2x256xf32, #tpu.memory_space<vmem>>, vector<2x256xf32>
    %14 = arith.addf %13, %12 : vector<2x256xf32>
    %c0_8 = arith.constant 0 : index
    %c0_9 = arith.constant 0 : index
    %15 = vector.load %arg3[%c0_8, %c0_9] : memref<2x256xf32, #tpu.memory_space<vmem>>, vector<2x256xf32>
    tpu.vector_store %arg3[%c0_8, %c0_9], %14 {strides = array<i32>} : memref<2x256xf32, #tpu.memory_space<vmem>>, vector<2x256xf32>,
    return
  }
  func.func @transform_0(%arg0: i32) -> (i32, i32) {
    %c0_i32 = arith.constant 0 : i32
    %c0_i32_0 = arith.constant 0 : i32
    return %arg0, %c0_i32 : i32, i32
  }
  func.func @transform_1(%arg0: i32) -> (i32, i32) {
    %c0_i32 = arith.constant 0 : i32
    %c0_i32_0 = arith.constant 0 : i32
    %c0_i32_1 = arith.constant 0 : i32
    return %c0_i32, %c0_i32_0 : i32, i32
  }
  func.func @transform_2(%arg0: i32) -> (i32, i32) {
    %c0_i32 = arith.constant 0 : i32
    %c0_i32_0 = arith.constant 0 : i32
    %c0_i32_1 = arith.constant 0 : i32
    return %c0_i32, %c0_i32_0 : i32, i32
  }
}

</mosaic_0001>

<llo_original>
// kernel: tpu_custom_call.1
$region0: #{tpu_custom_call.1}
  #allocation0 [shape = 'u32[]', space=smem, size = 0x4, offset = 0x4, fixed_abs, tag = 'smem constant byte address 0x4 - core index']
  #allocation1 [shape = 'u32[144,128]{1,0:T(1,128)}', space=vmem, size = 0x12000, scoped, tag = 'internal scratch']
  %s0 = inlined_call_operand.hbm [shape: f32[48,512], index: 0, kind: input, shape index: {}]
  %s1 = inlined_call_operand.hbm [shape: bf16[512,256], index: 1, kind: input, shape index: {}]
  %s2 = inlined_call_operand.hbm [shape: f32[2,256], index: 2, kind: output, shape index: {}]
  %s3 = sld [smem:[#allocation0]]
  $region53: #{tpu_custom_call.1} parent=0
    _
  %s5 = ssub.s32 1, %s3
  %s6 = scalar_select 0, %s5, %s3
  $region1: #{tpu_custom_call.1} parent=0
    #allocation2 [shape = 'u8[65536]{0}', space=vmem, size = 0x10000, scoped, tag = 'input window, operand 0']
    #allocation3 [shape = 's32[2]{0}', space=sflag, size = 0x8, scoped, tag = 'scoped memory for tpu_custom_call.1']
    #allocation4 [shape = 's32[2]{0}', space=sflag, size = 0x8, scoped, tag = 'scoped memory for tpu_custom_call.1']
    #allocation5 [shape = 'u8[262144]{0}', space=vmem, size = 0x40000, scoped, tag = 'input window, operand 1, single buffered']
    #allocation6 [shape = 's32[1]{0}', space=sflag, size = 0x4, scoped, tag = 'scoped memory for tpu_custom_call.1']
    #allocation7 [shape = 'u8[2048]{0}', space=vmem, size = 0x800, scoped, tag = 'output window, operand 0, single buffered']
    %7 = vsyncpa [#allocation3], 0
    %s8 = scalar_lea.sflag [#allocation3], 1
    %9 = vsyncpa %s8, 0
    %10 = vsyncpa [#allocation6], 0
    %11 = vsyncpa [#allocation4], 0
    loop: start=0, step=1, limit=5
    $region2: #{tpu_custom_call.1} parent=1 // loop_pre_header
      _
    $region3: #{tpu_custom_call.1} parent=1 // loop_header
      %s13 = sphi 0, %s17
      %p14 = scmp.ge.s32.totalorder %s13, 5
      %s23 = sphi 0, %s25
      %s26 = sphi 0, %s23
      %s27 = sphi 0, %s26
      %s43 = sphi 0, %s27
      %s47 = sphi 0, %s47
      %s49 = sphi 0, %s47
      %s50 = sphi 0, %s49
      %s64 = sphi 0, %s50
      %s68 = sphi 0, %s68
      %s70 = sphi 0, %s68
      %s71 = sphi 0, %s70
      %s85 = sphi 0, %s71
    $region4: #{tpu_custom_call.1} parent=1 // loop_header_branch
      %16 = sbr.rel (%p14) target = $region8
    $region5: #{tpu_custom_call.1} parent=1 // loop_body
      %s18 = ssub.s32 %s13, 1
      %s19 = ssub.s32 %s13, 2
      %s20 = sadd.s32 %s13, 1
      %s21 = ssub.s32 %s13, %s20
      %p22 = scmp.eq.s32.totalorder %s21, 0
      %s24 = sadd.s32 %s23, 1
      %s25 = scalar_select %p22, %s23, %s24
      %p28 = pneg %p22
      %p29 = scmp.eq.s32.totalorder %s13, 2
      %p30 = por %p28, %p29
      %p31 = scmp.ne.s32.totalorder %s23, %s26
      %p32 = scmp.eq.s32.totalorder %s13, 0
      %p33 = por %p31, %p32
      %p34 = scmp.ne.s32.totalorder %s23, %s26
      %p35 = scmp.eq.s32.totalorder %s18, 2
      %p36 = por %p34, %p35
      %p37 = scmp.ne.s32.totalorder %s26, %s27
      %p38 = scmp.eq.s32.totalorder %s18, 0
      %p39 = por %p37, %p38
      %p40 = scmp.ne.s32.totalorder %s26, %s27
      %p41 = scmp.eq.s32.totalorder %s19, 2
      %p42 = por %p40, %p41
      %p44 = scmp.ne.s32.totalorder %s27, %s43
      %p45 = scmp.eq.s32.totalorder %s19, 0
      %p46 = por %p44, %p45
      %s48 = sadd.s32 %s47, 1
      %p51 = scmp.eq.s32.totalorder %s13, 2
      %p52 = scmp.ne.s32.totalorder %s47, %s49
      %p53 = scmp.eq.s32.totalorder %s13, 0
      %p54 = por %p52, %p53
      %p55 = scmp.ne.s32.totalorder %s47, %s49
      %p56 = scmp.eq.s32.totalorder %s18, 2
      %p57 = por %p55, %p56
      %p58 = scmp.ne.s32.totalorder %s49, %s50
      %p59 = scmp.eq.s32.totalorder %s18, 0
      %p60 = por %p58, %p59
      %p61 = scmp.ne.s32.totalorder %s49, %s50
      %p62 = scmp.eq.s32.totalorder %s19, 2
      %p63 = por %p61, %p62
      %p65 = scmp.ne.s32.totalorder %s50, %s64
      %p66 = scmp.eq.s32.totalorder %s19, 0
      %p67 = por %p65, %p66
      %s69 = sadd.s32 %s68, 1
      %p72 = scmp.eq.s32.totalorder %s13, 2
      %p73 = scmp.ne.s32.totalorder %s68, %s70
      %p74 = scmp.eq.s32.totalorder %s13, 0
      %p75 = por %p73, %p74
      %p76 = scmp.ne.s32.totalorder %s68, %s70
      %p77 = scmp.eq.s32.totalorder %s18, 2
      %p78 = por %p76, %p77
      %p79 = scmp.ne.s32.totalorder %s70, %s71
      %p80 = scmp.eq.s32.totalorder %s18, 0
      %p81 = por %p79, %p80
      %p82 = scmp.ne.s32.totalorder %s70, %s71
      %p83 = scmp.eq.s32.totalorder %s19, 2
      %p84 = por %p82, %p83
      %p86 = scmp.ne.s32.totalorder %s71, %s85
      %p87 = scmp.eq.s32.totalorder %s19, 0
      %p88 = por %p86, %p87
      %p89 = scmp.le.s32.totalorder 1, %s13
      %p90 = scmp.lt.s32.totalorder %s13, 4
      %p91 = pnand %p89, %p90
      %p92 = pneg %p91
      // Predicated region
      $region9: #{tpu_custom_call.1} parent=5 // pred_check
        _
      $region10: #{tpu_custom_call.1} parent=5 // pred_check_branch
        %94 = sbr.rel (%p91) target = $region12
      $region11: #{tpu_custom_call.1} parent=5 // pred_region
        %s95 = ssub.s32 %s13, 1
        // Predicated region
        $region13: #{tpu_custom_call.1} parent=11 // pred_check
          %p96 = pneg %p60
        $region14: #{tpu_custom_call.1} parent=11 // pred_check_branch
          %98 = sbr.rel (%p96) target = $region16
        $region15: #{tpu_custom_call.1} parent=11 // pred_region
          %s100 = ssub.s32 8192, 8192
          %101 = vsyncadd [#allocation6], %s100
          %s102 = sshll.u32 [#allocation5], 4
          %s103 = int_to_ptr.vmem [resolvable:$true] %s102
          %108 = dma.hbm_to_vmem [thread:$0]  %s1, 8192, %s103, [#allocation6], 128, 128, 8
        $region16: #{tpu_custom_call.1} parent=11 // pred_fallthru
          _
      $region12: #{tpu_custom_call.1} parent=5 // pred_fallthru
        _
      %p109 = scmp.lt.s32.totalorder %s13, 3
      // Predicated region
      $region17: #{tpu_custom_call.1} parent=5 // pred_check
        %p110 = pneg %p109
      $region18: #{tpu_custom_call.1} parent=5 // pred_check_branch
        %112 = sbr.rel (%p110) target = $region20
      $region19: #{tpu_custom_call.1} parent=5 // pred_region
        // Predicated region
        $region21: #{tpu_custom_call.1} parent=19 // pred_check
          %p113 = pneg %p33
        $region22: #{tpu_custom_call.1} parent=19 // pred_check_branch
          %115 = sbr.rel (%p113) target = $region24
        $region23: #{tpu_custom_call.1} parent=19 // pred_region
          %s116 = sand.u32 %s23, 1
          %s117 = scalar_lea.sflag [#allocation3], %s116
          %s118 = sand.u32 %s23, 1
          %s119 = smul.addr %s118, 64
          %s120 = scalar_lea.vmem [#allocation2], %s119
          %s121 = smul.u32 2, %s13
          %s123 = ssub.s32 1024, 1024
          %124 = vsyncadd %s117, %s123
          %s125 = smul.addr %s121, 4
          %s126 = smul.addr %s125, 128
          %s127 = scalar_lea.hbm %s0, %s126
          %s128 = sshll.u32 %s120, 4
          %s129 = int_to_ptr.vmem [resolvable:$true] %s128
          %134 = dma.hbm_to_vmem [thread:$0]  %s127, 1024, %s129, %s117, 512, 512, 32
        $region24: #{tpu_custom_call.1} parent=19 // pred_fallthru
          _
      $region20: #{tpu_custom_call.1} parent=5 // pred_fallthru
        _
      %p135 = scmp.le.s32.totalorder 1, %s13
      %p136 = scmp.lt.s32.totalorder %s13, 4
      %p137 = pnand %p135, %p136
      %p138 = pneg %p137
      // Predicated region
      $region25: #{tpu_custom_call.1} parent=5 // pred_check
        _
      $region26: #{tpu_custom_call.1} parent=5 // pred_check_branch
        %140 = sbr.rel (%p137) target = $region28
      $region27: #{tpu_custom_call.1} parent=5 // pred_region
        %s141 = ssub.s32 %s13, 1
        %s142 = sand.u32 %s26, 1
        %s143 = scalar_lea.sflag [#allocation3], %s142
        %s144 = sand.u32 %s26, 1
        %s145 = smul.addr %s144, 64
        %s146 = scalar_lea.vmem [#allocation2], %s145
        // Predicated region
        $region29: #{tpu_custom_call.1} parent=27 // pred_check
          %p147 = pneg %p39
        $region30: #{tpu_custom_call.1} parent=27 // pred_check_branch
          %149 = sbr.rel (%p147) target = $region32
        $region31: #{tpu_custom_call.1} parent=27 // pred_region
          %150 = dma.done %s143, 1024
        $region32: #{tpu_custom_call.1} parent=27 // pred_fallthru
          _
        // Predicated region
        $region33: #{tpu_custom_call.1} parent=27 // pred_check
          %p151 = pneg %p60
        $region34: #{tpu_custom_call.1} parent=27 // pred_check_branch
          %153 = sbr.rel (%p151) target = $region36
        $region35: #{tpu_custom_call.1} parent=27 // pred_region
          %154 = dma.done [#allocation6], 8192
        $region36: #{tpu_custom_call.1} parent=27 // pred_fallthru
          _
        %s155 = sand.u32 %s26, 1
        %s156 = scalar_lea.sflag [#allocation3], %s155
        %s157 = sand.u32 %s26, 1
        %s158 = smul.addr %s157, 64
        %s159 = scalar_lea.vmem [#allocation2], %s158
        %p160 = pneg %p39
        %p161 = pneg %p36
        %p162 = pneg %p60
        %p163 = pneg %p57
        %p164 = pneg %p81
        %p165 = pneg %p78
        %s166 = smul.u32 2, %s18
        %p167 = scmp.eq.s32.totalorder %s18, 0
        // Predicated region
        $region37: #{tpu_custom_call.1} parent=27 // pred_check
          %p168 = pneg %p167
        $region38: #{tpu_custom_call.1} parent=27 // pred_check_branch
          %170 = sbr.rel (%p168) target = $region40
        $region39: #{tpu_custom_call.1} parent=27 // pred_region
          %171 = vst [vmem:[#allocation7] sm:$0xf] 0.0
        $region40: #{tpu_custom_call.1} parent=27 // pred_fallthru
          _
        %v172 = vld [vmem:[%s146] sm:$0xff]
        %v173 = vld [vmem:[%s146 + $0x8] sm:$0xff]
        %v174 = vld [vmem:[%s146 + $0x10] sm:$0xff]
        %v175 = vld [vmem:[%s146 + $0x18] sm:$0xff]
        %v176 = vld [vmem:[%s146 + $0x20] sm:$0xff]
        %v177 = vld [vmem:[%s146 + $0x28] sm:$0xff]
        %v178 = vld [vmem:[%s146 + $0x30] sm:$0xff]
        %v179 = vld [vmem:[%s146 + $0x38] sm:$0xff]
        %v180 = vpack.c.bf16 %v176, %v172
        %v181 = vpack.c.bf16 %v177, %v173
        %v182 = vpack.c.bf16 %v178, %v174
        %v183 = vpack.c.bf16 %v179, %v175
        %v184 = vld [vmem:[#allocation5] sm:$0xff]
        %v185 = vld [vmem:[#allocation5 + $0x8] sm:$0xff]
        %v186 = vld [vmem:[#allocation5 + $0x10] sm:$0xff]
        %v187 = vld [vmem:[#allocation5 + $0x18] sm:$0xff]
        %v188 = vld [vmem:[#allocation5 + $0x20] sm:$0xff]
        %v189 = vld [vmem:[#allocation5 + $0x28] sm:$0xff]
        %v190 = vld [vmem:[#allocation5 + $0x30] sm:$0xff]
        %v191 = vld [vmem:[#allocation5 + $0x38] sm:$0xff]
        %v192 = vld [vmem:[#allocation5 + $0x40] sm:$0xff]
        %v193 = vld [vmem:[#allocation5 + $0x48] sm:$0xff]
        %v194 = vld [vmem:[#allocation5 + $0x50] sm:$0xff]
        %v195 = vld [vmem:[#allocation5 + $0x58] sm:$0xff]
        %v196 = vld [vmem:[#allocation5 + $0x60] sm:$0xff]
        %v197 = vld [vmem:[#allocation5 + $0x68] sm:$0xff]
        %v198 = vld [vmem:[#allocation5 + $0x70] sm:$0xff]
        %v199 = vld [vmem:[#allocation5 + $0x78] sm:$0xff]
        %v200 = vld [vmem:[#allocation5 + $0x80] sm:$0xff]
        %v201 = vld [vmem:[#allocation5 + $0x88] sm:$0xff]
        %v202 = vld [vmem:[#allocation5 + $0x90] sm:$0xff]
        %v203 = vld [vmem:[#allocation5 + $0x98] sm:$0xff]
        %v204 = vld [vmem:[#allocation5 + $0xa0] sm:$0xff]
        %v205 = vld [vmem:[#allocation5 + $0xa8] sm:$0xff]
        %v206 = vld [vmem:[#allocation5 + $0xb0] sm:$0xff]
        %v207 = vld [vmem:[#allocation5 + $0xb8] sm:$0xff]
        %v208 = vld [vmem:[#allocation5 + $0xc0] sm:$0xff]
        %v209 = vld [vmem:[#allocation5 + $0xc8] sm:$0xff]
        %v210 = vld [vmem:[#allocation5 + $0xd0] sm:$0xff]
        %v211 = vld [vmem:[#allocation5 + $0xd8] sm:$0xff]
        %v212 = vld [vmem:[#allocation5 + $0xe0] sm:$0xff]
        %v213 = vld [vmem:[#allocation5 + $0xe8] sm:$0xff]
        %v214 = vld [vmem:[#allocation5 + $0xf0] sm:$0xff]
        %v215 = vld [vmem:[#allocation5 + $0xf8] sm:$0xff]
        %v216 = vld [vmem:[#allocation5 + $0x100] sm:$0xff]
        %v217 = vld [vmem:[#allocation5 + $0x108] sm:$0xff]
        %v218 = vld [vmem:[#allocation5 + $0x110] sm:$0xff]
        %v219 = vld [vmem:[#allocation5 + $0x118] sm:$0xff]
        %v220 = vld [vmem:[#allocation5 + $0x120] sm:$0xff]
        %v221 = vld [vmem:[#allocation5 + $0x128] sm:$0xff]
        %v222 = vld [vmem:[#allocation5 + $0x130] sm:$0xff]
        %v223 = vld [vmem:[#allocation5 + $0x138] sm:$0xff]
        %v224 = vld [vmem:[#allocation5 + $0x140] sm:$0xff]
        %v225 = vld [vmem:[#allocation5 + $0x148] sm:$0xff]
        %v226 = vld [vmem:[#allocation5 + $0x150] sm:$0xff]
        %v227 = vld [vmem:[#allocation5 + $0x158] sm:$0xff]
        %v228 = vld [vmem:[#allocation5 + $0x160] sm:$0xff]
        %v229 = vld [vmem:[#allocation5 + $0x168] sm:$0xff]
        %v230 = vld [vmem:[#allocation5 + $0x170] sm:$0xff]
        %v231 = vld [vmem:[#allocation5 + $0x178] sm:$0xff]
        %v232 = vld [vmem:[#allocation5 + $0x180] sm:$0xff]
        %v233 = vld [vmem:[#allocation5 + $0x188] sm:$0xff]
        %v234 = vld [vmem:[#allocation5 + $0x190] sm:$0xff]
        %v235 = vld [vmem:[#allocation5 + $0x198] sm:$0xff]
        %v236 = vld [vmem:[#allocation5 + $0x1a0] sm:$0xff]
        %v237 = vld [vmem:[#allocation5 + $0x1a8] sm:$0xff]
        %v238 = vld [vmem:[#allocation5 + $0x1b0] sm:$0xff]
        %v239 = vld [vmem:[#allocation5 + $0x1b8] sm:$0xff]
        %v240 = vld [vmem:[#allocation5 + $0x1c0] sm:$0xff]
        %v241 = vld [vmem:[#allocation5 + $0x1c8] sm:$0xff]
        %v242 = vld [vmem:[#allocation5 + $0x1d0] sm:$0xff]
        %v243 = vld [vmem:[#allocation5 + $0x1d8] sm:$0xff]
        %v244 = vld [vmem:[#allocation5 + $0x1e0] sm:$0xff]
        %v245 = vld [vmem:[#allocation5 + $0x1e8] sm:$0xff]
        %v246 = vld [vmem:[#allocation5 + $0x1f0] sm:$0xff]
        %v247 = vld [vmem:[#allocation5 + $0x1f8] sm:$0xff]
        %v312 = vunpack.c.l.b16 %v184
        %v313 = vunpack.c.h.b16 %v184
        %v314 = vunpack.c.l.b16 %v185
        %v315 = vunpack.c.h.b16 %v185
        %v316 = vunpack.c.l.b16 %v186
        %v317 = vunpack.c.h.b16 %v186
        %v318 = vunpack.c.l.b16 %v187
        %v319 = vunpack.c.h.b16 %v187
        %v320 = vunpack.c.l.b16 %v188
        %v321 = vunpack.c.h.b16 %v188
        %v322 = vunpack.c.l.b16 %v189
        %v323 = vunpack.c.h.b16 %v189
        %v324 = vunpack.c.l.b16 %v190
        %v325 = vunpack.c.h.b16 %v190
        %v326 = vunpack.c.l.b16 %v191
        %v327 = vunpack.c.h.b16 %v191
        %v328 = vunpack.c.l.b16 %v192
        %v329 = vunpack.c.h.b16 %v192
        %v330 = vunpack.c.l.b16 %v193
        %v331 = vunpack.c.h.b16 %v193
        %v332 = vunpack.c.l.b16 %v194
        %v333 = vunpack.c.h.b16 %v194
        %v334 = vunpack.c.l.b16 %v195
        %v335 = vunpack.c.h.b16 %v195
        %v336 = vunpack.c.l.b16 %v196
        %v337 = vunpack.c.h.b16 %v196
        %v338 = vunpack.c.l.b16 %v197
        %v339 = vunpack.c.h.b16 %v197
        %v340 = vunpack.c.l.b16 %v198
        %v341 = vunpack.c.h.b16 %v198
        %v342 = vunpack.c.l.b16 %v199
        %v343 = vunpack.c.h.b16 %v199
        %v344 = vunpack.c.l.b16 %v200
        %v345 = vunpack.c.h.b16 %v200
        %v346 = vunpack.c.l.b16 %v201
        %v347 = vunpack.c.h.b16 %v201
        %v348 = vunpack.c.l.b16 %v202
        %v349 = vunpack.c.h.b16 %v202
        %v350 = vunpack.c.l.b16 %v203
        %v351 = vunpack.c.h.b16 %v203
        %v352 = vunpack.c.l.b16 %v204
        %v353 = vunpack.c.h.b16 %v204
        %v354 = vunpack.c.l.b16 %v205
        %v355 = vunpack.c.h.b16 %v205
        %v356 = vunpack.c.l.b16 %v206
        %v357 = vunpack.c.h.b16 %v206
        %v358 = vunpack.c.l.b16 %v207
        %v359 = vunpack.c.h.b16 %v207
        %v360 = vunpack.c.l.b16 %v208
        %v361 = vunpack.c.h.b16 %v208
        %v362 = vunpack.c.l.b16 %v209
        %v363 = vunpack.c.h.b16 %v209
        %v364 = vunpack.c.l.b16 %v210
        %v365 = vunpack.c.h.b16 %v210
        %v366 = vunpack.c.l.b16 %v211
        %v367 = vunpack.c.h.b16 %v211
        %v368 = vunpack.c.l.b16 %v212
        %v369 = vunpack.c.h.b16 %v212
        %v370 = vunpack.c.l.b16 %v213
        %v371 = vunpack.c.h.b16 %v213
        %v372 = vunpack.c.l.b16 %v214
        %v373 = vunpack.c.h.b16 %v214
        %v374 = vunpack.c.l.b16 %v215
        %v375 = vunpack.c.h.b16 %v215
        %v376 = vunpack.c.l.b16 %v216
        %v377 = vunpack.c.h.b16 %v216
        %v378 = vunpack.c.l.b16 %v217
        %v379 = vunpack.c.h.b16 %v217
        %v380 = vunpack.c.l.b16 %v218
        %v381 = vunpack.c.h.b16 %v218
        %v382 = vunpack.c.l.b16 %v219
        %v383 = vunpack.c.h.b16 %v219
        %v384 = vunpack.c.l.b16 %v220
        %v385 = vunpack.c.h.b16 %v220
        %v386 = vunpack.c.l.b16 %v221
        %v387 = vunpack.c.h.b16 %v221
        %v388 = vunpack.c.l.b16 %v222
        %v389 = vunpack.c.h.b16 %v222
        %v390 = vunpack.c.l.b16 %v223
        %v391 = vunpack.c.h.b16 %v223
        %v392 = vunpack.c.l.b16 %v224
        %v393 = vunpack.c.h.b16 %v224
        %v394 = vunpack.c.l.b16 %v225
        %v395 = vunpack.c.h.b16 %v225
        %v396 = vunpack.c.l.b16 %v226
        %v397 = vunpack.c.h.b16 %v226
        %v398 = vunpack.c.l.b16 %v227
        %v399 = vunpack.c.h.b16 %v227
        %v400 = vunpack.c.l.b16 %v228
        %v401 = vunpack.c.h.b16 %v228
        %v402 = vunpack.c.l.b16 %v229
        %v403 = vunpack.c.h.b16 %v229
        %v404 = vunpack.c.l.b16 %v230
        %v405 = vunpack.c.h.b16 %v230
        %v406 = vunpack.c.l.b16 %v231
        %v407 = vunpack.c.h.b16 %v231
        %v408 = vunpack.c.l.b16 %v232
        %v409 = vunpack.c.h.b16 %v232
        %v410 = vunpack.c.l.b16 %v233
        %v411 = vunpack.c.h.b16 %v233
        %v412 = vunpack.c.l.b16 %v234
        %v413 = vunpack.c.h.b16 %v234
        %v414 = vunpack.c.l.b16 %v235
        %v415 = vunpack.c.h.b16 %v235
        %v416 = vunpack.c.l.b16 %v236
        %v417 = vunpack.c.h.b16 %v236
        %v418 = vunpack.c.l.b16 %v237
        %v419 = vunpack.c.h.b16 %v237
        %v420 = vunpack.c.l.b16 %v238
        %v421 = vunpack.c.h.b16 %v238
        %v422 = vunpack.c.l.b16 %v239
        %v423 = vunpack.c.h.b16 %v239
        %v424 = vunpack.c.l.b16 %v240
        %v425 = vunpack.c.h.b16 %v240
        %v426 = vunpack.c.l.b16 %v241
        %v427 = vunpack.c.h.b16 %v241
        %v428 = vunpack.c.l.b16 %v242
        %v429 = vunpack.c.h.b16 %v242
        %v430 = vunpack.c.l.b16 %v243
        %v431 = vunpack.c.h.b16 %v243
        %v432 = vunpack.c.l.b16 %v244
        %v433 = vunpack.c.h.b16 %v244
        %v434 = vunpack.c.l.b16 %v245
        %v435 = vunpack.c.h.b16 %v245
        %v436 = vunpack.c.l.b16 %v246
        %v437 = vunpack.c.h.b16 %v246
        %v438 = vunpack.c.l.b16 %v247
        %v439 = vunpack.c.h.b16 %v247
        %v440 = vpack.c.b16 %v314, %v312
        %v441 = vpack.c.b16 %v315, %v313
        %v442 = vpack.c.b16 %v318, %v316
        %v443 = vpack.c.b16 %v319, %v317
        %v444 = vpack.c.b16 %v322, %v320
        %v445 = vpack.c.b16 %v323, %v321
        %v446 = vpack.c.b16 %v326, %v324
        %v447 = vpack.c.b16 %v327, %v325
        %v448 = vpack.c.b16 %v330, %v328
        %v449 = vpack.c.b16 %v331, %v329
        %v450 = vpack.c.b16 %v334, %v332
        %v451 = vpack.c.b16 %v335, %v333
        %v452 = vpack.c.b16 %v338, %v336
        %v453 = vpack.c.b16 %v339, %v337
        %v454 = vpack.c.b16 %v342, %v340
        %v455 = vpack.c.b16 %v343, %v341
        %v456 = vpack.c.b16 %v346, %v344
        %v457 = vpack.c.b16 %v347, %v345
        %v458 = vpack.c.b16 %v350, %v348
        %v459 = vpack.c.b16 %v351, %v349
        %v460 = vpack.c.b16 %v354, %v352
        %v461 = vpack.c.b16 %v355, %v353
        %v462 = vpack.c.b16 %v358, %v356
        %v463 = vpack.c.b16 %v359, %v357
        %v464 = vpack.c.b16 %v362, %v360
        %v465 = vpack.c.b16 %v363, %v361
        %v466 = vpack.c.b16 %v366, %v364
        %v467 = vpack.c.b16 %v367, %v365
        %v468 = vpack.c.b16 %v370, %v368
        %v469 = vpack.c.b16 %v371, %v369
        %v470 = vpack.c.b16 %v374, %v372
        %v471 = vpack.c.b16 %v375, %v373
        %v472 = vpack.c.b16 %v378, %v376
        %v473 = vpack.c.b16 %v379, %v377
        %v474 = vpack.c.b16 %v382, %v380
        %v475 = vpack.c.b16 %v383, %v381
        %v476 = vpack.c.b16 %v386, %v384
        %v477 = vpack.c.b16 %v387, %v385
        %v478 = vpack.c.b16 %v390, %v388
        %v479 = vpack.c.b16 %v391, %v389
        %v480 = vpack.c.b16 %v394, %v392
        %v481 = vpack.c.b16 %v395, %v393
        %v482 = vpack.c.b16 %v398, %v396
        %v483 = vpack.c.b16 %v399, %v397
        %v484 = vpack.c.b16 %v402, %v400
        %v485 = vpack.c.b16 %v403, %v401
        %v486 = vpack.c.b16 %v406, %v404
        %v487 = vpack.c.b16 %v407, %v405
        %v488 = vpack.c.b16 %v410, %v408
        %v489 = vpack.c.b16 %v411, %v409
        %v490 = vpack.c.b16 %v414, %v412
        %v491 = vpack.c.b16 %v415, %v413
        %v492 = vpack.c.b16 %v418, %v416
        %v493 = vpack.c.b16 %v419, %v417
        %v494 = vpack.c.b16 %v422, %v420
        %v495 = vpack.c.b16 %v423, %v421
        %v496 = vpack.c.b16 %v426, %v424
        %v497 = vpack.c.b16 %v427, %v425
        %v498 = vpack.c.b16 %v430, %v428
        %v499 = vpack.c.b16 %v431, %v429
        %v500 = vpack.c.b16 %v434, %v432
        %v501 = vpack.c.b16 %v435, %v433
        %v502 = vpack.c.b16 %v438, %v436
        %v503 = vpack.c.b16 %v439, %v437
        %568 = vmatprep.subr.bf16.mxu0 %v455
        %569 = vmatpush1.bf16.msra.mxu0 %v454
        %570 = vmatprep.subr.bf16.mxu0 %v453
        %571 = vmatpush1.bf16.msra.mxu0 %v452
        %572 = vmatprep.subr.bf16.mxu0 %v451
        %573 = vmatpush1.bf16.msra.mxu0 %v450
        %574 = vmatprep.subr.bf16.mxu0 %v449
        %575 = vmatpush1.bf16.msra.mxu0 %v448
        %576 = vmatprep.subr.bf16.mxu0 %v447
        %577 = vmatpush1.bf16.msra.mxu0 %v446
        %578 = vmatprep.subr.bf16.mxu0 %v445
        %579 = vmatpush1.bf16.msra.mxu0 %v444
        %580 = vmatprep.subr.bf16.mxu0 %v443
        %581 = vmatpush1.bf16.msra.mxu0 %v442
        %582 = vmatprep.subr.bf16.mxu0 %v441
        %583 = vmatpush1.bf16.msra.mxu0 %v440
        %584 = vmatprep.subr.bf16.mxu0 %v471
        %585 = vmatpush2.bf16.msra.mxu0 %v470
        %586 = vmatprep.subr.bf16.mxu0 %v469
        %587 = vmatpush2.bf16.msra.mxu0 %v468
        %588 = vmatprep.subr.bf16.mxu0 %v467
        %589 = vmatpush2.bf16.msra.mxu0 %v466
        %590 = vmatprep.subr.bf16.mxu0 %v465
        %591 = vmatpush2.bf16.msra.mxu0 %v464
        %592 = vmatprep.subr.bf16.mxu0 %v463
        %593 = vmatpush2.bf16.msra.mxu0 %v462
        %594 = vmatprep.subr.bf16.mxu0 %v461
        %595 = vmatpush2.bf16.msra.mxu0 %v460
        %596 = vmatprep.subr.bf16.mxu0 %v459
        %597 = vmatpush2.bf16.msra.mxu0 %v458
        %598 = vmatprep.subr.bf16.mxu0 %v457
        %599 = vmatpush2.bf16.msra.mxu0 %v456
        %600 = vmatprep.mubr.bf16.mxu0 %v181
        %601 = vmatmul.mubr.bf16.gmra.mxu0 %v180
        %v602 = vpop.f32.mrf.mxu0
        %v603 = vadd.f32 0.0, %v602
        %v604 = vpop.f32.mrf.mxu0
        %v605 = vadd.f32 0.0, %v604
        %v606 = vpop.f32.mrf.mxu0
        %v607 = vadd.f32 0.0, %v606
        %v608 = vpop.f32.mrf.mxu0
        %v609 = vadd.f32 0.0, %v608
        %610 = vdwg.mxu0
        %611 = vmatprep.subr.bf16.mxu0 %v487
        %612 = vmatpush1.bf16.msra.mxu0 %v486
        %613 = vmatprep.subr.bf16.mxu0 %v485
        %614 = vmatpush1.bf16.msra.mxu0 %v484
        %615 = vmatprep.subr.bf16.mxu0 %v483
        %616 = vmatpush1.bf16.msra.mxu0 %v482
        %617 = vmatprep.subr.bf16.mxu0 %v481
        %618 = vmatpush1.bf16.msra.mxu0 %v480
        %619 = vmatprep.subr.bf16.mxu0 %v479
        %620 = vmatpush1.bf16.msra.mxu0 %v478
        %621 = vmatprep.subr.bf16.mxu0 %v477
        %622 = vmatpush1.bf16.msra.mxu0 %v476
        %623 = vmatprep.subr.bf16.mxu0 %v475
        %624 = vmatpush1.bf16.msra.mxu0 %v474
        %625 = vmatprep.subr.bf16.mxu0 %v473
        %626 = vmatpush1.bf16.msra.mxu0 %v472
        %627 = vmatprep.subr.bf16.mxu0 %v503
        %628 = vmatpush2.bf16.msra.mxu0 %v502
        %629 = vmatprep.subr.bf16.mxu0 %v501
        %630 = vmatpush2.bf16.msra.mxu0 %v500
        %631 = vmatprep.subr.bf16.mxu0 %v499
        %632 = vmatpush2.bf16.msra.mxu0 %v498
        %633 = vmatprep.subr.bf16.mxu0 %v497
        %634 = vmatpush2.bf16.msra.mxu0 %v496
        %635 = vmatprep.subr.bf16.mxu0 %v495
        %636 = vmatpush2.bf16.msra.mxu0 %v494
        %637 = vmatprep.subr.bf16.mxu0 %v493
        %638 = vmatpush2.bf16.msra.mxu0 %v492
        %639 = vmatprep.subr.bf16.mxu0 %v491
        %640 = vmatpush2.bf16.msra.mxu0 %v490
        %641 = vmatprep.subr.bf16.mxu0 %v489
        %642 = vmatpush2.bf16.msra.mxu0 %v488
        %643 = vmatprep.mubr.bf16.mxu0 %v183
        %644 = vmatmul.mubr.bf16.gmra.mxu0 %v182
        %v645 = vpop.f32.mrf.mxu0
        %v646 = vadd.f32 %v603, %v645
        %v647 = vpop.f32.mrf.mxu0
        %v648 = vadd.f32 %v605, %v647
        %v649 = vpop.f32.mrf.mxu0
        %v650 = vadd.f32 %v607, %v649
        %v651 = vpop.f32.mrf.mxu0
        %v652 = vadd.f32 %v609, %v651
        %653 = vdwg.mxu0
        %v654 = vadd.f32 %v646, %v650
        %v655 = vrot.slane %v654, 4
        %v656 = vadd.f32 %v654, %v655
        %v657 = vrot.slane %v656, 2
        %v658 = vadd.f32 %v656, %v657
        %v659 = vrot.slane %v658, 1
        %v660 = vadd.f32 %v658, %v659
        %v661 = vadd.f32 %v648, %v652
        %v662 = vrot.slane %v661, 4
        %v663 = vadd.f32 %v661, %v662
        %v664 = vrot.slane %v663, 2
        %v665 = vadd.f32 %v663, %v664
        %v666 = vrot.slane %v665, 1
        %v667 = vadd.f32 %v665, %v666
        %v668 = vmul.f32 %v646, %v646
        %v669 = vmul.f32 %v648, %v648
        %v670 = vmul.f32 %v650, %v650
        %v671 = vmul.f32 %v652, %v652
        %v672 = vadd.f32 %v668, %v670
        %v673 = vrot.slane %v672, 4
        %v674 = vadd.f32 %v672, %v673
        %v675 = vrot.slane %v674, 2
        %v676 = vadd.f32 %v674, %v675
        %v677 = vrot.slane %v676, 1
        %v678 = vadd.f32 %v676, %v677
        %v679 = vadd.f32 %v669, %v671
        %v680 = vrot.slane %v679, 4
        %v681 = vadd.f32 %v679, %v680
        %v682 = vrot.slane %v681, 2
        %v683 = vadd.f32 %v681, %v682
        %v684 = vrot.slane %v683, 1
        %v685 = vadd.f32 %v683, %v684
        %vm686 = vcmask 1040384
        %v687 = vsel %vm686, %v660, %v678
        %v688 = vsel %vm686, %v667, %v685
        %v689 = vld [vmem:[#allocation7] sm:$0xf]
        %v692 = vcombine.low %v687, %v688
        %v694 = vunpack.c.l.s4 1983009808
        %v695 = vunpack.c.0.s8 %v694
        %v696 = vlaneseq
        %v697 = vshrl.u32 %v696, 7
        %v698 = vsub.s32 %v695, %v697
        %v699 = vrot.slane %v692, %v698
        %v701 = vadd.f32 %v689, %v699
        %702 = vst [vmem:[#allocation7] sm:$0xf] %v701
        // Predicated region
        $region41: #{tpu_custom_call.1} parent=27 // pred_check
          %p703 = pneg %p78
        $region42: #{tpu_custom_call.1} parent=27 // pred_check_branch
          %705 = sbr.rel (%p703) target = $region44
        $region43: #{tpu_custom_call.1} parent=27 // pred_region
          %s707 = ssub.s32 64, 64
          %708 = vsyncadd [#allocation4], %s707
          %s710 = sshll.u32 [#allocation7], 4
          %s711 = int_to_ptr.vmem [resolvable:$true] %s710
          %713 = dma.vmem_to_hbm [thread:$0]  %s711, 64, %s2, [#allocation4]
        $region44: #{tpu_custom_call.1} parent=27 // pred_fallthru
          _
        // Predicated region
        $region45: #{tpu_custom_call.1} parent=27 // pred_check
          %p714 = pneg %p78
        $region46: #{tpu_custom_call.1} parent=27 // pred_check_branch
          %716 = sbr.rel (%p714) target = $region48
        $region47: #{tpu_custom_call.1} parent=27 // pred_region
          %717 = dma.done [#allocation4], 64
        $region48: #{tpu_custom_call.1} parent=27 // pred_fallthru
          _
      $region28: #{tpu_custom_call.1} parent=5 // pred_fallthru
        _
      %p718 = scmp.le.s32.totalorder 2, %s13
      // Predicated region
      $region49: #{tpu_custom_call.1} parent=5 // pred_check
        %p719 = pneg %p718
      $region50: #{tpu_custom_call.1} parent=5 // pred_check_branch
        %721 = sbr.rel (%p719) target = $region52
      $region51: #{tpu_custom_call.1} parent=5 // pred_region
        %s722 = ssub.s32 %s13, 2
      $region52: #{tpu_custom_call.1} parent=5 // pred_fallthru
        _
    $region6: #{tpu_custom_call.1} parent=1 // loop_footer
      %s17 = sadd.s32 1, %s13
    $region7: #{tpu_custom_call.1} parent=1 // loop_footer_branch
      %12 = sbr.rel target = $region3
    $region8: #{tpu_custom_call.1} parent=1 // loop_exit
      _
    %723 = vsyncpa [#allocation3], 1
    %s724 = scalar_lea.sflag [#allocation3], 1
    %725 = vsyncpa %s724, 1
    %726 = vsyncpa [#allocation6], 1
    %727 = vsyncpa [#allocation4], 1
    %s728 = scalar_lea.sflag [#allocation4], 1
    %729 = vsyncpa %s728, 1

</llo_original>
